<compile_context>
chip_gen: v7x
topology: tpu7x:2x2x1
jax: 0.10.0
libtpu: 0.0.40
codegen_flags: <defaults>
</compile_context>

<pallas_src>
import functools

import jax
import jax.numpy as jnp
from jax import lax
from jax.experimental import pallas as pl
from jax.experimental.pallas import tpu as pltpu


def _head_transform_kernel(x_ref, w_ref, p_ref, o_ref, acc_ref, *, eps, tn):
    # x_ref:   (TM, H)  input rows (native dtype), resident across the N axis
    # w_ref:   (H, TN)  weight column tile in (in, out) layout
    # p_ref:   (3, H)   packed [bias; gamma; beta]
    # o_ref:   (TM, H)  output rows (written only at the last N step)
    # acc_ref: (TM, H)  f32 staging scratch for the matmul result
    n = pl.program_id(1)

    # (TM, TN) slab of x @ W^T on the MXU with f32 accumulation; the weight was
    # transposed once in the wrapper so this is a plain contraction (no
    # in-kernel transpose of the weight).
    slab = jnp.dot(x_ref[...], w_ref[...], preferred_element_type=jnp.float32)

    if tn == acc_ref.shape[1]:
        # Single N step: full-width store.
        acc_ref[...] = slab
    else:
        col0 = n * tn
        if tn % 128 == 0:
            col0 = pl.multiple_of(col0, 128)
        acc_ref[:, pl.ds(col0, tn)] = slab

    @pl.when(n == pl.num_programs(1) - 1)
    def _():
        b = p_ref[0:1, :].astype(jnp.float32)
        g = p_ref[1:2, :].astype(jnp.float32)
        beta = p_ref[2:3, :].astype(jnp.float32)

        h = acc_ref[...] + b
        h = jnp.maximum(h, 0.0)                                 # ReLU

        # LayerNorm (biased variance, torch semantics) via two independent
        # reductions issued back-to-back.
        inv_h = 1.0 / h.shape[-1]
        mu = jnp.sum(h, axis=-1, keepdims=True) * inv_h
        ms = jnp.sum(h * h, axis=-1, keepdims=True) * inv_h
        var = jnp.maximum(ms - mu * mu, 0.0)                    # guard cancellation
        y = (h - mu) * lax.rsqrt(var + eps)                     # rsqrt -> EUP slot
        o_ref[...] = (y * g + beta).astype(o_ref.dtype)


def _round_up(x, m):
    return (x + m - 1) // m * m


def _vmem_limits():
    """Generation-aware VMEM ceiling (per TensorCore)."""
    try:
        cap = int(pltpu.get_tpu_info().vmem_capacity_bytes)
    except Exception:
        cap = 64 * 1024 * 1024              # conservative (v7x-sized) fallback
    limit = (cap * 3) // 4                  # ~48 MiB on v7x, ~96 MiB on v5e/v6e
    budget = max(limit - 8 * 1024 * 1024, 8 * 1024 * 1024)  # Mosaic scratch headroom
    return limit, budget


def _choose_tile_n(H, w_bytes, budget):
    """Column tile of the (in, out)-layout weight.  Weight tiles are
    double-buffered by the pipeline, so cap them at ~half the budget."""
    if H % 128 != 0:
        return H                                         # single full-width tile
    cands = [d for d in range(128, H + 1, 128) if H % d == 0]
    if not cands:
        return H
    w_budget = budget // 2
    for tn in sorted(cands, reverse=True):
        if 2 * H * tn * w_bytes <= w_budget:
            return tn
    return cands[0]


def _choose_tile_m(M, H, tn, x_bytes, out_bytes, w_bytes, budget):
    resident = 2 * H * tn * w_bytes + 2 * 8 * H * 4      # dbl-buf weight tile + params
    per_row = (2 * H * x_bytes                            # dbl-buffered x tile
               + 2 * H * out_bytes                        # dbl-buffered out tile
               + H * 4                                    # f32 staging scratch
               + 2 * H * 4)                               # epilogue temp headroom
    tm = max(budget - resident, 0) // per_row

    pack = max(8, 32 // max(x_bytes, 1))                  # 8 f32 / 16 bf16 / 32 int8
    tm = min(tm, 1024)
    # keep >= ~4 row steps when M allows (pipelining + megacore sharding)
    tm = min(tm, max(pack, _round_up(-(-M // 4), pack)))
    if tm >= 128:
        tm = (tm // 128) * 128                            # MXU-friendly (also native on v5e)
    else:
        tm = max(pack, (tm // pack) * pack)
    return int(tm)


def exam_prediction_head_transform(hidden_states, weight, bias, gamma, beta,
                                   eps=1e-5):
    """hidden_states: [..., H]; weight: [H, H] in PyTorch (out, in) layout;
    bias / gamma / beta: [H]."""
    orig_shape = hidden_states.shape
    H = orig_shape[-1]
    x2d = hidden_states.reshape(-1, H)
    M = x2d.shape[0]

    # One-time HBM transpose to (in, out) layout so the kernel contraction
    # needs no per-grid-step transpose of the weight.
    w_t = weight.T

    # bias / gamma / beta packed into a single small operand.
    params = jnp.stack([bias, gamma, beta])

    vmem_limit, vmem_budget = _vmem_limits()
    x_bytes = x2d.dtype.itemsize
    w_bytes = w_t.dtype.itemsize
    out_bytes = x_bytes

    tn = _choose_tile_n(H, w_bytes, vmem_budget)
    tm = _choose_tile_m(M, H, tn, x_bytes, out_bytes, w_bytes, vmem_budget)

    grid = (pl.cdiv(M, tm), H // tn)

    kernel = functools.partial(_head_transform_kernel, eps=eps, tn=tn)

    out = pl.pallas_call(
        kernel,
        out_shape=jax.ShapeDtypeStruct((M, H), hidden_states.dtype),
        grid=grid,
        in_specs=[
            pl.BlockSpec((tm, H), lambda i, n: (i, 0)),   # x rows (constant over n)
            pl.BlockSpec((H, tn), lambda i, n: (0, n)),   # weight column tile
            pl.BlockSpec((3, H), lambda i, n: (0, 0)),    # packed bias/gamma/beta
        ],
        out_specs=pl.BlockSpec((tm, H), lambda i, n: (i, 0)),
        scratch_shapes=[pltpu.VMEM((tm, H), jnp.float32)],
        compiler_params=pltpu.CompilerParams(
            dimension_semantics=("parallel", "arbitrary"),
            vmem_limit_bytes=vmem_limit,
        ),
    )(x2d, w_t, params)

    return out.reshape(orig_shape)


if __name__ == "__main__":
    # Small, deterministic setup consistent with the module's forward:
    # hidden_states: [batch, seq, hidden]
    batch, seq, hidden = 2, 8, 32
    eps = 1e-5

    key = jax.random.PRNGKey(0)
    k_x, k_w, k_b = jax.random.split(key, 3)

    x = jax.random.normal(k_x, (batch, seq, hidden), dtype=jnp.float32)

    # Deterministic parameter init (shapes from nn.Linear(hidden, hidden) and
    # nn.LayerNorm(hidden) defaults: gamma=ones, beta=zeros).
    bound = 1.0 / jnp.sqrt(hidden)
    weight = jax.random.uniform(k_w, (hidden, hidden), dtype=jnp.float32,
                                minval=-bound, maxval=bound)   # (out, in)
    bias = jax.random.uniform(k_b, (hidden,), dtype=jnp.float32,
                              minval=-bound, maxval=bound)
    gamma = jnp.ones((hidden,), dtype=jnp.float32)
    beta = jnp.zeros((hidden,), dtype=jnp.float32)

    out = exam_prediction_head_transform(x, weight, bias, gamma, beta, eps)
    out = jax.block_until_ready(out)

    # Reference check in plain JAX (same math as the PyTorch forward).
    h_ref = jnp.maximum(x @ weight.T + bias, 0.0)
    mu = jnp.mean(h_ref, axis=-1, keepdims=True)
    var = jnp.mean((h_ref - mu) ** 2, axis=-1, keepdims=True)
    ref = (h_ref - mu) / jnp.sqrt(var + eps) * gamma + beta

    assert out.shape == x.shape
    assert jnp.allclose(out, ref, atol=1e-4, rtol=1e-4), "mismatch vs reference"
    print("KERNEL_OK")
</pallas_src>

<mosaic_0001>
module attributes {stable_mosaic.version = 11 : i64} {
  func.func @_head_transform_kernel(%arg0: i32, %arg1: i32, %arg2: memref<8x32xf32, #tpu.memory_space<vmem>>, %arg3: memref<32x32xf32, #tpu.memory_space<vmem>>, %arg4: memref<3x32xf32, #tpu.memory_space<vmem>>, %arg5: memref<8x32xf32, #tpu.memory_space<vmem>>, %arg6: memref<8x32xf32, #tpu.memory_space<vmem>>) attributes {dimension_semantics = [#tpu.dimension_semantics<parallel>, #tpu.dimension_semantics<arbitrary>], iteration_bounds = array<i64: 2, 1>, scalar_prefetch = 0 : i64, scratch_operands = 1 : i64, tpu.core_type = #tpu.core_type<tc>, window_params = [{transform_indices = @transform_0, window_bounds = array<i64: 8, 32>}, {transform_indices = @transform_1, window_bounds = array<i64: 32, 32>}, {pipeline_mode = #tpu.pipeline_mode<synchronous>, transform_indices = @transform_2, window_bounds = array<i64: 3, 32>}, {transform_indices = @transform_3, window_bounds = array<i64: 8, 32>}]} {
    %c0 = arith.constant 0 : index
    %c0_0 = arith.constant 0 : index
    %0 = vector.load %arg2[%c0, %c0_0] : memref<8x32xf32, #tpu.memory_space<vmem>>, vector<8x32xf32>
    %c0_1 = arith.constant 0 : index
    %c0_2 = arith.constant 0 : index
    %1 = vector.load %arg3[%c0_1, %c0_2] : memref<32x32xf32, #tpu.memory_space<vmem>>, vector<32x32xf32>
    %cst = arith.constant dense<0.000000e+00> : vector<8x32xf32>
    %2 = tpu.matmul %0, %1, %cst {dimension_numbers = #tpu.dot_dimension_numbers<[1], [0], [0], [1], [0, 0, 1, 1], [], []>} : vector<8x32xf32>, vector<32x32xf32>, vector<8x32xf32> -> vector<8x32xf32>
    %c0_3 = arith.constant 0 : index
    %c0_4 = arith.constant 0 : index
    %3 = vector.load %arg6[%c0_3, %c0_4] : memref<8x32xf32, #tpu.memory_space<vmem>>, vector<8x32xf32>
    tpu.vector_store %arg6[%c0_3, %c0_4], %2 {strides = array<i32>} : memref<8x32xf32, #tpu.memory_space<vmem>>, vector<8x32xf32>,
    %c0_i32 = arith.constant 0 : i32
    %4 = arith.cmpi eq, %arg1, %c0_i32 : i32
    %5 = arith.extui %4 : i1 to i32
    %c0_i32_5 = arith.constant 0 : i32
    %6 = arith.cmpi ne, %5, %c0_i32_5 : i32
    scf.if %6 {
      %c0_6 = arith.constant 0 : index
      %c0_7 = arith.constant 0 : index
      %7 = vector.load %arg4[%c0_6, %c0_7] : memref<3x32xf32, #tpu.memory_space<vmem>>, vector<1x32xf32>
      %c1 = arith.constant 1 : index
      %c0_8 = arith.constant 0 : index
      %8 = vector.load %arg4[%c1, %c0_8] : memref<3x32xf32, #tpu.memory_space<vmem>>, vector<1x32xf32>
      %c2 = arith.constant 2 : index
      %c0_9 = arith.constant 0 : index
      %9 = vector.load %arg4[%c2, %c0_9] : memref<3x32xf32, #tpu.memory_space<vmem>>, vector<1x32xf32>
      %c0_10 = arith.constant 0 : index
      %c0_11 = arith.constant 0 : index
      %10 = vector.load %arg6[%c0_10, %c0_11] : memref<8x32xf32, #tpu.memory_space<vmem>>, vector<8x32xf32>
      %11 = vector.broadcast %7 : vector<1x32xf32> to vector<8x32xf32>
      %12 = arith.addf %10, %11 : vector<8x32xf32>
      %cst_12 = arith.constant 0.000000e+00 : f32
      %13 = vector.broadcast %cst_12 : f32 to vector<8x32xf32>
      %14 = arith.maximumf %12, %13 : vector<8x32xf32>
      %cst_13 = arith.constant dense<0.000000e+00> : vector<8xf32>
      %15 = vector.multi_reduction <add>, %14, %cst_13 [1] : vector<8x32xf32> to vector<8xf32>
      %16 = vector.shape_cast %15 : vector<8xf32> to vector<8x1xf32>
      %cst_14 = arith.constant 3.125000e-02 : f32
      %17 = vector.broadcast %cst_14 : f32 to vector<8x1xf32>
      %18 = arith.mulf %16, %17 : vector<8x1xf32>
      %19 = arith.mulf %14, %14 : vector<8x32xf32>
      %cst_15 = arith.constant dense<0.000000e+00> : vector<8xf32>
      %20 = vector.multi_reduction <add>, %19, %cst_15 [1] : vector<8x32xf32> to vector<8xf32>
      %21 = vector.shape_cast %20 : vector<8xf32> to vector<8x1xf32>
      %cst_16 = arith.constant 3.125000e-02 : f32
      %22 = vector.broadcast %cst_16 : f32 to vector<8x1xf32>
      %23 = arith.mulf %21, %22 : vector<8x1xf32>
      %24 = arith.mulf %18, %18 : vector<8x1xf32>
      %25 = arith.subf %23, %24 : vector<8x1xf32>
      %cst_17 = arith.constant 0.000000e+00 : f32
      %26 = vector.broadcast %cst_17 : f32 to vector<8x1xf32>
      %27 = arith.maximumf %25, %26 : vector<8x1xf32>
      %28 = vector.broadcast %18 : vector<8x1xf32> to vector<8x32xf32>
      %29 = arith.subf %14, %28 : vector<8x32xf32>
      %cst_18 = arith.constant 9.99999974E-6 : f32
      %30 = vector.broadcast %cst_18 : f32 to vector<8x1xf32>
      %31 = arith.addf %27, %30 : vector<8x1xf32>
      %32 = math.rsqrt %31 : vector<8x1xf32>
      %33 = vector.broadcast %32 : vector<8x1xf32> to vector<8x32xf32>
      %34 = arith.mulf %29, %33 : vector<8x32xf32>
      %35 = vector.broadcast %8 : vector<1x32xf32> to vector<8x32xf32>
      %36 = arith.mulf %34, %35 : vector<8x32xf32>
      %37 = vector.broadcast %9 : vector<1x32xf32> to vector<8x32xf32>
      %38 = arith.addf %36, %37 : vector<8x32xf32>
      %c0_19 = arith.constant 0 : index
      %c0_20 = arith.constant 0 : index
      %39 = vector.load %arg5[%c0_19, %c0_20] : memref<8x32xf32, #tpu.memory_space<vmem>>, vector<8x32xf32>
      tpu.vector_store %arg5[%c0_19, %c0_20], %38 {strides = array<i32>} : memref<8x32xf32, #tpu.memory_space<vmem>>, vector<8x32xf32>,
    } else {
    }
    return
  }
  func.func @transform_0(%arg0: i32, %arg1: i32) -> (i32, i32) {
    %c0_i32 = arith.constant 0 : i32
    %c0_i32_0 = arith.constant 0 : i32
    return %arg0, %c0_i32 : i32, i32
  }
  func.func @transform_1(%arg0: i32, %arg1: i32) -> (i32, i32) {
    %c0_i32 = arith.constant 0 : i32
    %c0_i32_0 = arith.constant 0 : i32
    return %c0_i32, %arg1 : i32, i32
  }
  func.func @transform_2(%arg0: i32, %arg1: i32) -> (i32, i32) {
    %c0_i32 = arith.constant 0 : i32
    %c0_i32_0 = arith.constant 0 : i32
    %c0_i32_1 = arith.constant 0 : i32
    return %c0_i32, %c0_i32_0 : i32, i32
  }
  func.func @transform_3(%arg0: i32, %arg1: i32) -> (i32, i32) {
    %c0_i32 = arith.constant 0 : i32
    %c0_i32_0 = arith.constant 0 : i32
    return %arg0, %c0_i32 : i32, i32
  }
}

</mosaic_0001>

<llo_original>
// kernel: tpu_custom_call.1
$region0: #{tpu_custom_call.1}
  #allocation0 [shape = 'u32[]', space=smem, size = 0x4, offset = 0x4, fixed_abs, tag = 'smem constant byte address 0x4 - core index']
  #allocation1 [shape = 'u32[144,128]{1,0:T(1,128)}', space=vmem, size = 0x12000, scoped, tag = 'internal scratch']
  #allocation2 [shape = 'f32[8,32]{1,0:T(8,128)}', space=vmem, size = 0x1000, scoped, tag = 'scratch operand']
  %s0 = inlined_call_operand.hbm [shape: f32[16,32], index: 0, kind: input, shape index: {}]
  %s1 = inlined_call_operand.hbm [shape: f32[32,32], index: 1, kind: input, shape index: {}]
  %s2 = inlined_call_operand.vmem [shape: f32[3,32], index: 2, kind: input, shape index: {}]
  %s3 = inlined_call_operand.hbm [shape: f32[16,32], index: 3, kind: output, shape index: {}]
  %s4 = sld [smem:[#allocation0]]
  $region57: #{tpu_custom_call.1} parent=0
    _
  %s6 = ssub.s32 1, %s4
  %s7 = scalar_select 0, %s6, %s4
  $region1: #{tpu_custom_call.1} parent=0
    #allocation3 [shape = 'u8[8192]{0}', space=vmem, size = 0x2000, scoped, tag = 'input window, operand 0']
    #allocation4 [shape = 's32[2]{0}', space=sflag, size = 0x8, scoped, tag = 'scoped memory for tpu_custom_call.1']
    #allocation5 [shape = 's32[2]{0}', space=sflag, size = 0x8, scoped, tag = 'scoped memory for tpu_custom_call.1']
    #allocation6 [shape = 'u8[16384]{0}', space=vmem, size = 0x4000, scoped, tag = 'input window, operand 1, single buffered']
    #allocation7 [shape = 's32[1]{0}', space=sflag, size = 0x4, scoped, tag = 'scoped memory for tpu_custom_call.1']
    #allocation8 [shape = 'u8[8192]{0}', space=vmem, size = 0x2000, scoped, tag = 'output window, operand 0']
    %8 = vsyncpa [#allocation4], 0
    %s9 = scalar_lea.sflag [#allocation4], 1
    %10 = vsyncpa %s9, 0
    %11 = vsyncpa [#allocation7], 0
    %12 = vsyncpa [#allocation5], 0
    %s13 = scalar_lea.sflag [#allocation5], 1
    %14 = vsyncpa %s13, 0
    loop: start=0, step=1, limit=4
    $region2: #{tpu_custom_call.1} parent=1 // loop_pre_header
      _
    $region3: #{tpu_custom_call.1} parent=1 // loop_header
      %s16 = sphi 0, %s20
      %p17 = scmp.ge.s32.totalorder %s16, 4
      %s23 = sphi 0, %s35
      %s24 = sphi 0, %s31
      %s25 = sphi 0, %s23
      %s26 = sphi 0, %s24
      %s27 = sphi 0, %s25
      %s28 = sphi 0, %s26
      %s38 = sphi 0, %s40
      %s41 = sphi 0, %s38
      %s42 = sphi 0, %s41
      %s58 = sphi 0, %s42
      %s64 = sphi 0, %s66
      %s67 = sphi 0, %s64
      %s68 = sphi 0, %s67
      %s84 = sphi 0, %s68
      %s88 = sphi 0, %s88
      %s90 = sphi 0, %s88
      %s91 = sphi 0, %s90
      %s105 = sphi 0, %s91
      %s111 = sphi 0, %s113
      %s114 = sphi 0, %s111
      %s115 = sphi 0, %s114
      %s131 = sphi 0, %s115
    $region4: #{tpu_custom_call.1} parent=1 // loop_header_branch
      %19 = sbr.rel (%p17) target = $region8
    $region5: #{tpu_custom_call.1} parent=1 // loop_body
      %s21 = ssub.s32 %s16, 1
      %s22 = ssub.s32 %s16, 2
      %s29 = sadd.s32 1, %s24
      %p30 = scmp.ge.s32.totalorder %s29, 1
      %s31 = scalar_select %p30, 0, %s29
      %s32 = sadd.s32 1, %s23
      %s33 = scalar_select %p30, %s32, %s23
      %p34 = scmp.ge.s32.totalorder %s33, 2
      %s35 = scalar_select %p34, 0, %s33
      %s36 = ssub.s32 %s23, %s35
      %p37 = scmp.eq.s32.totalorder %s36, 0
      %s39 = sadd.s32 %s38, 1
      %s40 = scalar_select %p37, %s38, %s39
      %p43 = pneg %p37
      %p44 = scmp.eq.s32.totalorder %s16, 1
      %p45 = por %p43, %p44
      %p46 = scmp.ne.s32.totalorder %s38, %s41
      %p47 = scmp.eq.s32.totalorder %s16, 0
      %p48 = por %p46, %p47
      %p49 = scmp.ne.s32.totalorder %s38, %s41
      %p50 = scmp.eq.s32.totalorder %s21, 1
      %p51 = por %p49, %p50
      %p52 = scmp.ne.s32.totalorder %s41, %s42
      %p53 = scmp.eq.s32.totalorder %s21, 0
      %p54 = por %p52, %p53
      %p55 = scmp.ne.s32.totalorder %s41, %s42
      %p56 = scmp.eq.s32.totalorder %s22, 1
      %p57 = por %p55, %p56
      %p59 = scmp.ne.s32.totalorder %s42, %s58
      %p60 = scmp.eq.s32.totalorder %s22, 0
      %p61 = por %p59, %p60
      %s62 = ssub.s32 %s24, %s31
      %p63 = scmp.eq.s32.totalorder %s62, 0
      %s65 = sadd.s32 %s64, 1
      %s66 = scalar_select %p63, %s64, %s65
      %p69 = pneg %p63
      %p70 = scmp.eq.s32.totalorder %s16, 1
      %p71 = por %p69, %p70
      %p72 = scmp.ne.s32.totalorder %s64, %s67
      %p73 = scmp.eq.s32.totalorder %s16, 0
      %p74 = por %p72, %p73
      %p75 = scmp.ne.s32.totalorder %s64, %s67
      %p76 = scmp.eq.s32.totalorder %s21, 1
      %p77 = por %p75, %p76
      %p78 = scmp.ne.s32.totalorder %s67, %s68
      %p79 = scmp.eq.s32.totalorder %s21, 0
      %p80 = por %p78, %p79
      %p81 = scmp.ne.s32.totalorder %s67, %s68
      %p82 = scmp.eq.s32.totalorder %s22, 1
      %p83 = por %p81, %p82
      %p85 = scmp.ne.s32.totalorder %s68, %s84
      %p86 = scmp.eq.s32.totalorder %s22, 0
      %p87 = por %p85, %p86
      %s89 = sadd.s32 %s88, 1
      %p92 = scmp.eq.s32.totalorder %s16, 1
      %p93 = scmp.ne.s32.totalorder %s88, %s90
      %p94 = scmp.eq.s32.totalorder %s16, 0
      %p95 = por %p93, %p94
      %p96 = scmp.ne.s32.totalorder %s88, %s90
      %p97 = scmp.eq.s32.totalorder %s21, 1
      %p98 = por %p96, %p97
      %p99 = scmp.ne.s32.totalorder %s90, %s91
      %p100 = scmp.eq.s32.totalorder %s21, 0
      %p101 = por %p99, %p100
      %p102 = scmp.ne.s32.totalorder %s90, %s91
      %p103 = scmp.eq.s32.totalorder %s22, 1
      %p104 = por %p102, %p103
      %p106 = scmp.ne.s32.totalorder %s91, %s105
      %p107 = scmp.eq.s32.totalorder %s22, 0
      %p108 = por %p106, %p107
      %s109 = ssub.s32 %s23, %s35
      %p110 = scmp.eq.s32.totalorder %s109, 0
      %s112 = sadd.s32 %s111, 1
      %s113 = scalar_select %p110, %s111, %s112
      %p116 = pneg %p110
      %p117 = scmp.eq.s32.totalorder %s16, 1
      %p118 = por %p116, %p117
      %p119 = scmp.ne.s32.totalorder %s111, %s114
      %p120 = scmp.eq.s32.totalorder %s16, 0
      %p121 = por %p119, %p120
      %p122 = scmp.ne.s32.totalorder %s111, %s114
      %p123 = scmp.eq.s32.totalorder %s21, 1
      %p124 = por %p122, %p123
      %p125 = scmp.ne.s32.totalorder %s114, %s115
      %p126 = scmp.eq.s32.totalorder %s21, 0
      %p127 = por %p125, %p126
      %p128 = scmp.ne.s32.totalorder %s114, %s115
      %p129 = scmp.eq.s32.totalorder %s22, 1
      %p130 = por %p128, %p129
      %p132 = scmp.ne.s32.totalorder %s115, %s131
      %p133 = scmp.eq.s32.totalorder %s22, 0
      %p134 = por %p132, %p133
      %p135 = scmp.le.s32.totalorder 1, %s16
      %p136 = scmp.lt.s32.totalorder %s16, 3
      %p137 = pnand %p135, %p136
      %p138 = pneg %p137
      // Predicated region
      $region9: #{tpu_custom_call.1} parent=5 // pred_check
        _
      $region10: #{tpu_custom_call.1} parent=5 // pred_check_branch
        %140 = sbr.rel (%p137) target = $region12
      $region11: #{tpu_custom_call.1} parent=5 // pred_region
        %s141 = ssub.s32 %s16, 1
        // Predicated region
        $region13: #{tpu_custom_call.1} parent=11 // pred_check
          %p142 = pneg %p80
        $region14: #{tpu_custom_call.1} parent=11 // pred_check_branch
          %144 = sbr.rel (%p142) target = $region16
        $region15: #{tpu_custom_call.1} parent=11 // pred_region
          %s146 = ssub.s32 512, 512
          %147 = vsyncadd [#allocation7], %s146
          %s148 = smul.addr %s26, 128
          %s149 = scalar_lea.hbm %s1, %s148
          %s150 = sshll.u32 [#allocation6], 4
          %s151 = int_to_ptr.vmem [resolvable:$true] %s150
          %156 = dma.hbm_to_vmem [thread:$0]  %s149, 512, %s151, [#allocation7], 128, 128, 8
        $region16: #{tpu_custom_call.1} parent=11 // pred_fallthru
          _
        // Predicated region
        $region17: #{tpu_custom_call.1} parent=11 // pred_check
          %p157 = pneg %p101
        $region18: #{tpu_custom_call.1} parent=11 // pred_check_branch
          %159 = sbr.rel (%p157) target = $region20
        $region19: #{tpu_custom_call.1} parent=11 // pred_region
          _
        $region20: #{tpu_custom_call.1} parent=11 // pred_fallthru
          _
      $region12: #{tpu_custom_call.1} parent=5 // pred_fallthru
        _
      %p160 = scmp.lt.s32.totalorder %s16, 2
      // Predicated region
      $region21: #{tpu_custom_call.1} parent=5 // pred_check
        %p161 = pneg %p160
      $region22: #{tpu_custom_call.1} parent=5 // pred_check_branch
        %163 = sbr.rel (%p161) target = $region24
      $region23: #{tpu_custom_call.1} parent=5 // pred_region
        // Predicated region
        $region25: #{tpu_custom_call.1} parent=23 // pred_check
          %p164 = pneg %p48
        $region26: #{tpu_custom_call.1} parent=23 // pred_check_branch
          %166 = sbr.rel (%p164) target = $region28
        $region27: #{tpu_custom_call.1} parent=23 // pred_region
          %s167 = sand.u32 %s38, 1
          %s168 = scalar_lea.sflag [#allocation4], %s167
          %s169 = sand.u32 %s38, 1
          %s170 = smul.addr %s169, 8
          %s171 = scalar_lea.vmem [#allocation3], %s170
          %s173 = ssub.s32 128, 128
          %174 = vsyncadd %s168, %s173
          %s175 = smul.addr %s23, 128
          %s176 = scalar_lea.hbm %s0, %s175
          %s178 = sshll.u32 %s171, 4
          %s179 = int_to_ptr.vmem [resolvable:$true] %s178
          %181 = dma.hbm_to_vmem [thread:$0]  %s176, 128, %s179, %s168
        $region28: #{tpu_custom_call.1} parent=23 // pred_fallthru
          _
      $region24: #{tpu_custom_call.1} parent=5 // pred_fallthru
        _
      %p182 = scmp.le.s32.totalorder 1, %s16
      %p183 = scmp.lt.s32.totalorder %s16, 3
      %p184 = pnand %p182, %p183
      %p185 = pneg %p184
      // Predicated region
      $region29: #{tpu_custom_call.1} parent=5 // pred_check
        _
      $region30: #{tpu_custom_call.1} parent=5 // pred_check_branch
        %187 = sbr.rel (%p184) target = $region32
      $region31: #{tpu_custom_call.1} parent=5 // pred_region
        %s188 = ssub.s32 %s16, 1
        %s189 = sand.u32 %s41, 1
        %s190 = scalar_lea.sflag [#allocation4], %s189
        %s191 = sand.u32 %s41, 1
        %s192 = smul.addr %s191, 8
        %s193 = scalar_lea.vmem [#allocation3], %s192
        // Predicated region
        $region33: #{tpu_custom_call.1} parent=31 // pred_check
          %p194 = pneg %p54
        $region34: #{tpu_custom_call.1} parent=31 // pred_check_branch
          %196 = sbr.rel (%p194) target = $region36
        $region35: #{tpu_custom_call.1} parent=31 // pred_region
          %197 = dma.done %s190, 128
        $region36: #{tpu_custom_call.1} parent=31 // pred_fallthru
          _
        // Predicated region
        $region37: #{tpu_custom_call.1} parent=31 // pred_check
          %p198 = pneg %p80
        $region38: #{tpu_custom_call.1} parent=31 // pred_check_branch
          %200 = sbr.rel (%p198) target = $region40
        $region39: #{tpu_custom_call.1} parent=31 // pred_region
          %201 = dma.done [#allocation7], 512
        $region40: #{tpu_custom_call.1} parent=31 // pred_fallthru
          _
        %s202 = sand.u32 %s41, 1
        %s203 = scalar_lea.sflag [#allocation4], %s202
        %s204 = sand.u32 %s41, 1
        %s205 = smul.addr %s204, 8
        %s206 = scalar_lea.vmem [#allocation3], %s205
        %p207 = pneg %p54
        %p208 = pneg %p51
        %p209 = pneg %p80
        %p210 = pneg %p77
        %p211 = pneg %p101
        %p212 = pneg %p98
        %p213 = pneg %p127
        %p214 = pneg %p124
        %s215 = sand.u32 %s114, 1
        %s216 = scalar_lea.sflag [#allocation5], %s215
        %s217 = sand.u32 %s114, 1
        %s218 = smul.addr %s217, 8
        %s219 = scalar_lea.vmem [#allocation8], %s218
        %v220 = vld [vmem:[%s193] sm:$0xff]
        %v221 = vld [vmem:[#allocation6] sm:$0xff]
        %v222 = vld [vmem:[#allocation6 + $0x8] sm:$0xff]
        %v223 = vld [vmem:[#allocation6 + $0x10] sm:$0xff]
        %v224 = vld [vmem:[#allocation6 + $0x18] sm:$0xff]
        %vm225 = vcmask 261120
        %v227 = vsel %vm225, %v220, 0
        %229 = vmatprep.subr.mxu0 0.0
        %230 = vmatpush1.msra.mxu0 %v221
        %231 = vmatprep.subr.mxu0 0.0
        %232 = vmatpush1.msra.mxu0 %v222
        %233 = vmatprep.subr.mxu0 0.0
        %234 = vmatpush1.msra.mxu0 %v223
        %235 = vmatprep.subr.mxu0 0.0
        %236 = vmatpush1.msra.mxu0 %v224
        %237 = vmatprep.subr.mxu0 0.0
        %238 = vmatpush1.msra.mxu0 0.0
        %239 = vmatprep.subr.mxu0 0.0
        %240 = vmatpush1.msra.mxu0 0.0
        %241 = vmatprep.subr.mxu0 0.0
        %242 = vmatpush1.msra.mxu0 0.0
        %243 = vmatprep.subr.mxu0 0.0
        %244 = vmatpush1.msra.mxu0 0.0
        %245 = vmatprep.subr.mxu0 0.0
        %246 = vmatpush1.msra.mxu0 0.0
        %247 = vmatprep.subr.mxu0 0.0
        %248 = vmatpush1.msra.mxu0 0.0
        %249 = vmatprep.subr.mxu0 0.0
        %250 = vmatpush1.msra.mxu0 0.0
        %251 = vmatprep.subr.mxu0 0.0
        %252 = vmatpush1.msra.mxu0 0.0
        %253 = vmatprep.subr.mxu0 0.0
        %254 = vmatpush1.msra.mxu0 0.0
        %255 = vmatprep.subr.mxu0 0.0
        %256 = vmatpush1.msra.mxu0 0.0
        %257 = vmatprep.subr.mxu0 0.0
        %258 = vmatpush1.msra.mxu0 0.0
        %259 = vmatprep.subr.mxu0 0.0
        %260 = vmatpush1.msra.mxu0 0.0
        %261 = vmatprep.subr.mxu0 0.0
        %262 = vmatpush1.msra.mxu0 0.0
        %263 = vmatprep.subr.mxu0 0.0
        %264 = vmatpush1.msra.mxu0 0.0
        %265 = vmatprep.subr.mxu0 0.0
        %266 = vmatpush1.msra.mxu0 0.0
        %267 = vmatprep.subr.mxu0 0.0
        %268 = vmatpush1.msra.mxu0 0.0
        %269 = vmatprep.subr.mxu0 0.0
        %270 = vmatpush1.msra.mxu0 0.0
        %271 = vmatprep.subr.mxu0 0.0
        %272 = vmatpush1.msra.mxu0 0.0
        %273 = vmatprep.subr.mxu0 0.0
        %274 = vmatpush1.msra.mxu0 0.0
        %275 = vmatprep.subr.mxu0 0.0
        %276 = vmatpush1.msra.mxu0 0.0
        %277 = vmatprep.subr.mxu0 0.0
        %278 = vmatpush1.msra.mxu0 0.0
        %279 = vmatprep.subr.mxu0 0.0
        %280 = vmatpush1.msra.mxu0 0.0
        %281 = vmatprep.subr.mxu0 0.0
        %282 = vmatpush1.msra.mxu0 0.0
        %283 = vmatprep.subr.mxu0 0.0
        %284 = vmatpush1.msra.mxu0 0.0
        %285 = vmatprep.subr.mxu0 0.0
        %286 = vmatpush1.msra.mxu0 0.0
        %287 = vmatprep.subr.mxu0 0.0
        %288 = vmatpush1.msra.mxu0 0.0
        %289 = vmatprep.subr.mxu0 0.0
        %290 = vmatpush1.msra.mxu0 0.0
        %291 = vmatprep.subr.mxu0 0.0
        %292 = vmatpush1.msra.mxu0 0.0
        %293 = vmatprep.mubr.f32.mxu0 0.0
        %294 = vmatmul.mubr.f32.gmra.mrb[0].mxu0 %v227
        %v295 = vpop.f32.mrb[0].mxu0
        %v296 = vadd.f32 0.0, %v295
        %v297 = vpop.f32.mrb[0].mxu0
        %298 = vdwg.mxu0
        %299 = vst.msk [vmem:[#allocation2] sm:$0xff] %vm225, %v296
        %p300 = scmp.eq.s32.totalorder %s26, 0
        // Predicated region
        $region41: #{tpu_custom_call.1} parent=31 // pred_check
          %p301 = pneg %p300
        $region42: #{tpu_custom_call.1} parent=31 // pred_check_branch
          %303 = sbr.rel (%p301) target = $region44
        $region43: #{tpu_custom_call.1} parent=31 // pred_region
          %v304 = vld [vmem:[%s2] sm:$0x1]
          %v305 = vld [vmem:[%s2 + $0x1] sm:$0x1]
          %v306 = vld [vmem:[%s2 + $0x2] sm:$0x1]
          %v307 = vld [vmem:[#allocation2] sm:$0xff]
          %v308 = vlaneseq
          %v309 = vshrl.u32 %v308, 7
          %v310 = vsub.s32 0, %v309
          %v311 = vrot.slane %v304, %v310
          %v312 = vadd.f32 %v307, %v311
          %v313 = vmax.f32 %v312, 0.0
          %v314 = vsel %vm225, %v313, 0.0
          %315 = vadd.xlane.f32.xlu0 %v314
          %v316 = vpop.xlane.xlu0 %315
          %v317 = vmul.f32 %v316, 0.03125
          %v318 = vmul.f32 %v313, %v313
          %v319 = vsel %vm225, %v318, 0.0
          %320 = vadd.xlane.f32.xlu0 %v319
          %v321 = vpop.xlane.xlu0 %320
          %v322 = vmul.f32 %v321, 0.03125
          %v323 = vmul.f32 %v317, %v317
          %v324 = vsub.f32 %v322, %v323
          %v325 = vmax.f32 %v324, 0.0
          %v326 = vsub.f32 %v313, %v317
          %v327 = vadd.f32 %v325, 1e-05
          %v328 = vrsqrt.pop %v327
          %v329 = vmul.f32 %v326, %v328
          %v330 = vlaneseq
          %v331 = vshrl.u32 %v330, 7
          %v332 = vsub.s32 0, %v331
          %v333 = vrot.slane %v305, %v332
          %v334 = vmul.f32 %v329, %v333
          %v335 = vlaneseq
          %v336 = vshrl.u32 %v335, 7
          %v337 = vsub.s32 0, %v336
          %v338 = vrot.slane %v306, %v337
          %v339 = vadd.f32 %v334, %v338
          %340 = vst.msk [vmem:[%s219] sm:$0xff] %vm225, %v339
        $region44: #{tpu_custom_call.1} parent=31 // pred_fallthru
          _
        %s341 = sand.u32 %s114, 1
        %s342 = scalar_lea.sflag [#allocation5], %s341
        %s343 = sand.u32 %s114, 1
        %s344 = smul.addr %s343, 8
        %s345 = scalar_lea.vmem [#allocation8], %s344
        // Predicated region
        $region45: #{tpu_custom_call.1} parent=31 // pred_check
          %p346 = pneg %p124
        $region46: #{tpu_custom_call.1} parent=31 // pred_check_branch
          %348 = sbr.rel (%p346) target = $region48
        $region47: #{tpu_custom_call.1} parent=31 // pred_region
          %s350 = ssub.s32 128, 128
          %351 = vsyncadd %s342, %s350
          %s352 = smul.addr %s25, 128
          %s353 = scalar_lea.hbm %s3, %s352
          %s355 = sshll.u32 %s345, 4
          %s356 = int_to_ptr.vmem [resolvable:$true] %s355
          %358 = dma.vmem_to_hbm [thread:$0]  %s356, 128, %s353, %s342
        $region48: #{tpu_custom_call.1} parent=31 // pred_fallthru
          _
      $region32: #{tpu_custom_call.1} parent=5 // pred_fallthru
        _
      %p359 = scmp.le.s32.totalorder 2, %s16
      // Predicated region
      $region49: #{tpu_custom_call.1} parent=5 // pred_check
        %p360 = pneg %p359
      $region50: #{tpu_custom_call.1} parent=5 // pred_check_branch
        %362 = sbr.rel (%p360) target = $region52
      $region51: #{tpu_custom_call.1} parent=5 // pred_region
        %s363 = ssub.s32 %s16, 2
        // Predicated region
        $region53: #{tpu_custom_call.1} parent=51 // pred_check
          %p364 = pneg %p130
        $region54: #{tpu_custom_call.1} parent=51 // pred_check_branch
          %366 = sbr.rel (%p364) target = $region56
        $region55: #{tpu_custom_call.1} parent=51 // pred_region
          %s367 = sand.u32 %s115, 1
          %s368 = scalar_lea.sflag [#allocation5], %s367
          %s369 = sand.u32 %s115, 1
          %s370 = smul.addr %s369, 8
          %s371 = scalar_lea.vmem [#allocation8], %s370
          %372 = dma.done %s368, 128
        $region56: #{tpu_custom_call.1} parent=51 // pred_fallthru
          _
      $region52: #{tpu_custom_call.1} parent=5 // pred_fallthru
        _
    $region6: #{tpu_custom_call.1} parent=1 // loop_footer
      %s20 = sadd.s32 1, %s16
    $region7: #{tpu_custom_call.1} parent=1 // loop_footer_branch
      %15 = sbr.rel target = $region3
    $region8: #{tpu_custom_call.1} parent=1 // loop_exit
      _
    %373 = vsyncpa [#allocation4], 1
    %s374 = scalar_lea.sflag [#allocation4], 1
    %375 = vsyncpa %s374, 1
    %376 = vsyncpa [#allocation7], 1
    %377 = vsyncpa [#allocation5], 1
    %s378 = scalar_lea.sflag [#allocation5], 1
    %379 = vsyncpa %s378, 1

</llo_original>
